<compile_context>
chip_gen: v7x
topology: tpu7x:2x2x1
jax: 0.10.0
libtpu: 0.0.40
codegen_flags: <defaults>
</compile_context>

<pallas_src>
import math

import jax
import jax.numpy as jnp
from jax.experimental import pallas as pl
from jax.experimental.pallas import tpu as pltpu


# ---------------------------------------------------------------------------
# Pallas kernel
# ---------------------------------------------------------------------------
def data_embedding_kernel(xc_ref, idx_ref, w_ref, pe_ref, out_ref):
    # xc_ref : (TM, 3C)        bf16 circular conv taps [x[l-1] | x[l] | x[l+1]]
    # idx_ref: (TM, 4)         int32 time-feature indices [month, day, weekday, hour]
    # w_ref  : (128 + 3C, D)   bf16 fused slab [4 tables (4*32 rows) ; W_k0^T ; W_k1^T ; W_k2^T]
    # pe_ref : (TM, D)         bf16 positional encoding, pre-tiled to the row block
    # out_ref: (TM, D)         f32 output block
    TM, KC = xc_ref.shape
    NMARK = idx_ref.shape[-1]
    K1 = w_ref.shape[0] - KC          # one-hot slab width (4 * 32 = 128)
    VMAX = K1 // NMARK                # 32 rows reserved per table

    # --- one (TM, 128) one-hot slab covering all 4 fixed embedding tables ---
    idx = idx_ref[...]
    iota = jax.lax.broadcasted_iota(jnp.int32, (TM, K1), 1)
    hot = idx[:, 0:1] == iota
    for f in range(1, NMARK):         # static unroll (4 marks, disjoint 32-lane ranges)
        hot = jnp.logical_or(hot, (idx[:, f:f + 1] + f * VMAX) == iota)

    # --- single fused MXU matmul (128-aligned lane concat), f32 accumulate ---
    lhs = jnp.concatenate([hot.astype(jnp.bfloat16), xc_ref[...]], axis=-1)
    acc = jnp.dot(lhs, w_ref[...], preferred_element_type=jnp.float32)   # (TM, D) f32

    # --- positional embedding + store (dropout == identity in eval mode) ---
    out_ref[...] = (acc + pe_ref[...].astype(jnp.float32)).astype(out_ref.dtype)


# ---------------------------------------------------------------------------
# Parameter construction (deterministic, matches the PyTorch __init__ shapes)
# ---------------------------------------------------------------------------
def sinusoid_table(n, d):
    """Same formula as PositionalEmbedding / FixedEmbedding in the PyTorch code."""
    pos = jnp.arange(n, dtype=jnp.float32)[:, None]
    div = jnp.exp(jnp.arange(0, d, 2, dtype=jnp.float32) * -(math.log(10000.0) / d))
    tab = jnp.zeros((n, d), jnp.float32)
    tab = tab.at[:, 0::2].set(jnp.sin(pos * div))
    tab = tab.at[:, 1::2].set(jnp.cos(pos * div))
    return tab


def make_params(key, c_in, d_model):
    # Conv1d weight (d_model, c_in, 3), kaiming_normal_(fan_in, leaky_relu):
    std = math.sqrt(2.0) / math.sqrt(c_in * 3)
    w_torch = std * jax.random.normal(key, (d_model, c_in, 3), dtype=jnp.float32)
    # Conv taps re-laid-out for channels-last matmul, stacked along K: (3*c_in, d_model)
    taps = jnp.concatenate([w_torch[:, :, k].T for k in range(3)], axis=0)

    # Fixed embedding tables; x_mark column order f=0..3 -> [month(13), day(32),
    # weekday(7), hour(24)]; each zero-padded to 32 rows so table f owns rows
    # [32f, 32f+32) of the concatenated slab.
    sizes = (13, 32, 7, 24)
    vmax = 32
    tabs = [jnp.pad(sinusoid_table(s, d_model), ((0, vmax - s), (0, 0))) for s in sizes]
    tables_cat = jnp.concatenate(tabs, axis=0)                 # (128, d_model)

    w_slab = jnp.concatenate([tables_cat, taps], axis=0)       # (128 + 3*c_in, d_model)
    return w_torch, tables_cat, w_slab


# ---------------------------------------------------------------------------
# Wrapper
# ---------------------------------------------------------------------------
def data_embedding(x, x_mark, w_slab, pe, *, batch_tile=None, target_rows=512):
    B, L, C = x.shape
    K, D = w_slab.shape
    NMARK = x_mark.shape[-1]
    assert K == 128 + 3 * C

    # Batch elements per grid step: aim for ~target_rows MXU rows per step.
    if batch_tile is None:
        bt = max(1, min(B, target_rows // max(L, 1)))
        while B % bt:
            bt -= 1
    else:
        bt = batch_tile
        assert B % bt == 0, "batch_tile must divide batch"
    if (bt * L) % 8 != 0:          # keep row blocks sublane-aligned
        bt = B
    TM = bt * L
    grid = (B // bt,)

    # bf16 operands (halved DMA / VMEM), f32 accumulation inside the kernel.
    x_bf = x.astype(jnp.bfloat16)
    # Tiny wrapper-side circular im2col: [x[l-1] | x[l] | x[l+1]] per row (3C lanes).
    x_cat = jnp.concatenate(
        [jnp.roll(x_bf, 1, axis=1), x_bf, jnp.roll(x_bf, -1, axis=1)], axis=-1
    ).reshape(B * L, 3 * C)
    idx2 = x_mark.astype(jnp.int32).reshape(B * L, NMARK)
    w_bf = w_slab.astype(jnp.bfloat16)
    pe_tile = jnp.tile(pe[:L].astype(jnp.bfloat16), (bt, 1))    # (TM, D), grid-invariant

    out = pl.pallas_call(
        data_embedding_kernel,
        out_shape=jax.ShapeDtypeStruct((B * L, D), jnp.float32),
        grid_spec=pltpu.PrefetchScalarGridSpec(
            num_scalar_prefetch=0,
            grid=grid,
            in_specs=[
                pl.BlockSpec((TM, 3 * C), lambda i: (i, 0)),
                pl.BlockSpec((TM, NMARK), lambda i: (i, 0)),
                pl.BlockSpec((K, D), lambda i: (0, 0)),       # grid-invariant weight slab
                pl.BlockSpec((TM, D), lambda i: (0, 0)),      # grid-invariant pe tile
            ],
            out_specs=pl.BlockSpec((TM, D), lambda i: (i, 0)),
        ),
        compiler_params=pltpu.CompilerParams(
            dimension_semantics=("parallel",)),
    )(x_cat, idx2, w_bf, pe_tile)
    return out.reshape(B, L, D)


# ---------------------------------------------------------------------------
# Pure-JAX reference (mirrors the PyTorch forward in eval mode), f32 math
# ---------------------------------------------------------------------------
def reference(x, x_mark, w_torch, tables_cat, pe):
    B, L, C = x.shape
    x_pad = jnp.concatenate([x[:, -1:, :], x, x[:, :1, :]], axis=1)
    conv = sum(
        jnp.einsum("blc,dc->bld", x_pad[:, k:k + L, :], w_torch[:, :, k],
                   precision=jax.lax.Precision.HIGHEST)
        for k in range(3))
    temporal = sum(tables_cat[x_mark[:, :, f] + 32 * f] for f in range(4))
    return conv + temporal + pe[None, :L, :]


# ---------------------------------------------------------------------------
if __name__ == "__main__":
    # batch, seq_len, c_in, d_model; freq='h' -> 4 time-feature columns.
    # d_model=128 keeps the output store lane-dense (multiple of 128 lanes).
    B, L, C, D = 4, 16, 6, 128

    key = jax.random.PRNGKey(0)
    kx, km, kw = jax.random.split(key, 3)

    x = jax.random.normal(kx, (B, L, C), dtype=jnp.float32)
    x_mark = jnp.stack(
        [
            jax.random.randint(jax.random.fold_in(km, 0), (B, L), 0, 13),   # month
            jax.random.randint(jax.random.fold_in(km, 1), (B, L), 0, 32),   # day
            jax.random.randint(jax.random.fold_in(km, 2), (B, L), 0, 7),    # weekday
            jax.random.randint(jax.random.fold_in(km, 3), (B, L), 0, 24),   # hour
        ],
        axis=-1,
    ).astype(jnp.int32)

    w_torch, tables_cat, w_slab = make_params(kw, C, D)
    pe = sinusoid_table(64, D)          # max_len buffer; wrapper slices pe[:L]

    out = jax.block_until_ready(data_embedding(x, x_mark, w_slab, pe))

    # Reference computed from operands rounded to the same bf16 precision the kernel uses.
    rnd = lambda a: a.astype(jnp.bfloat16).astype(jnp.float32)
    ref = reference(rnd(x), x_mark, rnd(w_torch), rnd(tables_cat), rnd(pe))

    assert out.shape == (B, L, D)
    assert jnp.allclose(out, ref, atol=2e-4, rtol=2e-4), "mismatch vs JAX reference"

    # Also exercise a multi-step grid (2 batch elements per grid step).
    out2 = jax.block_until_ready(data_embedding(x, x_mark, w_slab, pe, batch_tile=2))
    assert jnp.allclose(out2, ref, atol=2e-4, rtol=2e-4), "mismatch vs reference (batch_tile=2)"

    print("KERNEL_OK")
</pallas_src>

<mosaic_0001>
module attributes {stable_mosaic.version = 11 : i64} {
  func.func @data_embedding_kernel(%arg0: i32, %arg1: memref<64x18xbf16, #tpu.memory_space<vmem>>, %arg2: memref<64x4xi32, #tpu.memory_space<vmem>>, %arg3: memref<146x128xbf16, #tpu.memory_space<vmem>>, %arg4: memref<64x128xbf16, #tpu.memory_space<vmem>>, %arg5: memref<64x128xf32, #tpu.memory_space<vmem>>) attributes {dimension_semantics = [#tpu.dimension_semantics<parallel>], iteration_bounds = array<i64: 1>, scalar_prefetch = 0 : i64, scratch_operands = 0 : i64, tpu.core_type = #tpu.core_type<tc>, window_params = [{transform_indices = @transform_0, window_bounds = array<i64: 64, 18>}, {transform_indices = @transform_1, window_bounds = array<i64: 64, 4>}, {pipeline_mode = #tpu.pipeline_mode<synchronous>, transform_indices = @transform_2, window_bounds = array<i64: 146, 128>}, {pipeline_mode = #tpu.pipeline_mode<synchronous>, transform_indices = @transform_3, window_bounds = array<i64: 64, 128>}, {transform_indices = @transform_4, window_bounds = array<i64: 64, 128>}]} {
    %c0 = arith.constant 0 : index
    %c0_0 = arith.constant 0 : index
    %0 = vector.load %arg2[%c0, %c0_0] : memref<64x4xi32, #tpu.memory_space<vmem>>, vector<64x4xi32>
    %1 = tpu.iota {dimensions = array<i32: 1>} : vector<64x128xi32>
    %2 = vector.extract_strided_slice %0 {offsets = [0, 0], sizes = [64, 1], strides = [1, 1]} : vector<64x4xi32> to vector<64x1xi32>
    %3 = vector.broadcast %2 : vector<64x1xi32> to vector<64x128xi32>
    %4 = arith.cmpi eq, %3, %1 : vector<64x128xi32>
    %5 = vector.extract_strided_slice %0 {offsets = [0, 1], sizes = [64, 1], strides = [1, 1]} : vector<64x4xi32> to vector<64x1xi32>
    %c32_i32 = arith.constant 32 : i32
    %6 = vector.broadcast %c32_i32 : i32 to vector<64x1xi32>
    %7 = arith.addi %5, %6 : vector<64x1xi32>
    %8 = vector.broadcast %7 : vector<64x1xi32> to vector<64x128xi32>
    %9 = arith.cmpi eq, %8, %1 : vector<64x128xi32>
    %10 = arith.ori %4, %9 : vector<64x128xi1>
    %11 = vector.extract_strided_slice %0 {offsets = [0, 2], sizes = [64, 1], strides = [1, 1]} : vector<64x4xi32> to vector<64x1xi32>
    %c64_i32 = arith.constant 64 : i32
    %12 = vector.broadcast %c64_i32 : i32 to vector<64x1xi32>
    %13 = arith.addi %11, %12 : vector<64x1xi32>
    %14 = vector.broadcast %13 : vector<64x1xi32> to vector<64x128xi32>
    %15 = arith.cmpi eq, %14, %1 : vector<64x128xi32>
    %16 = arith.ori %10, %15 : vector<64x128xi1>
    %17 = vector.extract_strided_slice %0 {offsets = [0, 3], sizes = [64, 1], strides = [1, 1]} : vector<64x4xi32> to vector<64x1xi32>
    %c96_i32 = arith.constant 96 : i32
    %18 = vector.broadcast %c96_i32 : i32 to vector<64x1xi32>
    %19 = arith.addi %17, %18 : vector<64x1xi32>
    %20 = vector.broadcast %19 : vector<64x1xi32> to vector<64x128xi32>
    %21 = arith.cmpi eq, %20, %1 : vector<64x128xi32>
    %22 = arith.ori %16, %21 : vector<64x128xi1>
    %23 = arith.extui %22 : vector<64x128xi1> to vector<64x128xi32>
    %24 = arith.sitofp %23 : vector<64x128xi32> to vector<64x128xf32>
    %25 = arith.truncf %24 : vector<64x128xf32> to vector<64x128xbf16>
    %c0_1 = arith.constant 0 : index
    %c0_2 = arith.constant 0 : index
    %26 = vector.load %arg1[%c0_1, %c0_2] : memref<64x18xbf16, #tpu.memory_space<vmem>>, vector<64x18xbf16>
    %27 = tpu.concatenate %25, %26 in 1 : vector<64x128xbf16>, vector<64x18xbf16> -> vector<64x146xbf16>
    %c0_3 = arith.constant 0 : index
    %c0_4 = arith.constant 0 : index
    %28 = vector.load %arg3[%c0_3, %c0_4] : memref<146x128xbf16, #tpu.memory_space<vmem>>, vector<146x128xbf16>
    %cst = arith.constant dense<0.000000e+00> : vector<64x128xf32>
    %29 = tpu.matmul %27, %28, %cst {dimension_numbers = #tpu.dot_dimension_numbers<[1], [0], [0], [1], [0, 0, 1, 1], [], []>} : vector<64x146xbf16>, vector<146x128xbf16>, vector<64x128xf32> -> vector<64x128xf32>
    %c0_5 = arith.constant 0 : index
    %c0_6 = arith.constant 0 : index
    %30 = vector.load %arg4[%c0_5, %c0_6] : memref<64x128xbf16, #tpu.memory_space<vmem>>, vector<64x128xbf16>
    %31 = arith.extf %30 : vector<64x128xbf16> to vector<64x128xf32>
    %32 = arith.addf %29, %31 : vector<64x128xf32>
    %c0_7 = arith.constant 0 : index
    %c0_8 = arith.constant 0 : index
    %33 = vector.load %arg5[%c0_7, %c0_8] : memref<64x128xf32, #tpu.memory_space<vmem>>, vector<64x128xf32>
    tpu.vector_store %arg5[%c0_7, %c0_8], %32 {strides = array<i32>} : memref<64x128xf32, #tpu.memory_space<vmem>>, vector<64x128xf32>,
    return
  }
  func.func @transform_0(%arg0: i32) -> (i32, i32) {
    %c0_i32 = arith.constant 0 : i32
    %c0_i32_0 = arith.constant 0 : i32
    return %arg0, %c0_i32 : i32, i32
  }
  func.func @transform_1(%arg0: i32) -> (i32, i32) {
    %c0_i32 = arith.constant 0 : i32
    %c0_i32_0 = arith.constant 0 : i32
    return %arg0, %c0_i32 : i32, i32
  }
  func.func @transform_2(%arg0: i32) -> (i32, i32) {
    %c0_i32 = arith.constant 0 : i32
    %c0_i32_0 = arith.constant 0 : i32
    %c0_i32_1 = arith.constant 0 : i32
    return %c0_i32, %c0_i32_0 : i32, i32
  }
  func.func @transform_3(%arg0: i32) -> (i32, i32) {
    %c0_i32 = arith.constant 0 : i32
    %c0_i32_0 = arith.constant 0 : i32
    %c0_i32_1 = arith.constant 0 : i32
    return %c0_i32, %c0_i32_0 : i32, i32
  }
  func.func @transform_4(%arg0: i32) -> (i32, i32) {
    %c0_i32 = arith.constant 0 : i32
    %c0_i32_0 = arith.constant 0 : i32
    return %arg0, %c0_i32 : i32, i32
  }
}

</mosaic_0001>

<llo_original>
// kernel: tpu_custom_call.1
$region0: #{tpu_custom_call.1}
  #allocation0 [shape = 'u32[]', space=smem, size = 0x4, offset = 0x4, fixed_abs, tag = 'smem constant byte address 0x4 - core index']
  #allocation1 [shape = 'u32[144,128]{1,0:T(1,128)}', space=vmem, size = 0x12000, scoped, tag = 'internal scratch']
  %s0 = inlined_call_operand.vmem [shape: bf16[64,18], index: 0, kind: input, shape index: {}]
  %s1 = inlined_call_operand.vmem [shape: s32[64,4], index: 1, kind: input, shape index: {}]
  %s2 = inlined_call_operand.vmem [shape: bf16[146,128], index: 2, kind: input, shape index: {}]
  %s3 = inlined_call_operand.vmem [shape: bf16[64,128], index: 3, kind: input, shape index: {}]
  %s4 = inlined_call_operand.hbm [shape: f32[64,128], index: 4, kind: output, shape index: {}]
  %s5 = sld [smem:[#allocation0]]
  $region26: #{tpu_custom_call.1} parent=0
    _
  %s7 = ssub.s32 1, %s5
  %s8 = scalar_select 0, %s7, %s5
  $region1: #{tpu_custom_call.1} parent=0
    #allocation2 [shape = 'u8[32768]{0}', space=vmem, size = 0x8000, scoped, tag = 'output window, operand 0, single buffered']
    #allocation3 [shape = 's32[1]{0}', space=sflag, size = 0x4, scoped, tag = 'scoped memory for tpu_custom_call.1']
    %9 = vsyncpa [#allocation3], 0
    // Predicated region
    $region2: #{tpu_custom_call.1} parent=1 // pred_check
      _
    $region3: #{tpu_custom_call.1} parent=1 // pred_check_branch
      %11 = sbr.rel (0) target = $region5
    $region4: #{tpu_custom_call.1} parent=1 // pred_region
      _
    $region5: #{tpu_custom_call.1} parent=1 // pred_fallthru
      _
    // Predicated region
    $region6: #{tpu_custom_call.1} parent=1 // pred_check
      _
    $region7: #{tpu_custom_call.1} parent=1 // pred_check_branch
      %13 = sbr.rel (0) target = $region9
    $region8: #{tpu_custom_call.1} parent=1 // pred_region
      _
    $region9: #{tpu_custom_call.1} parent=1 // pred_fallthru
      _
    // Predicated region
    $region10: #{tpu_custom_call.1} parent=1 // pred_check
      _
    $region11: #{tpu_custom_call.1} parent=1 // pred_check_branch
      %15 = sbr.rel (0) target = $region13
    $region12: #{tpu_custom_call.1} parent=1 // pred_region
      _
    $region13: #{tpu_custom_call.1} parent=1 // pred_fallthru
      _
    // Predicated region
    $region14: #{tpu_custom_call.1} parent=1 // pred_check
      _
    $region15: #{tpu_custom_call.1} parent=1 // pred_check_branch
      %17 = sbr.rel (0) target = $region17
    $region16: #{tpu_custom_call.1} parent=1 // pred_region
      _
    $region17: #{tpu_custom_call.1} parent=1 // pred_fallthru
      _
    %v19 = vld [vmem:[%s1] sm:$0xff]
    %v20 = vld [vmem:[%s1 + $0x8] sm:$0xff]
    %v21 = vld [vmem:[%s1 + $0x10] sm:$0xff]
    %v22 = vld [vmem:[%s1 + $0x18] sm:$0xff]
    %v23 = vld [vmem:[%s1 + $0x20] sm:$0xff]
    %v24 = vld [vmem:[%s1 + $0x28] sm:$0xff]
    %v25 = vld [vmem:[%s1 + $0x30] sm:$0xff]
    %v26 = vld [vmem:[%s1 + $0x38] sm:$0xff]
    %v27 = vlaneseq
    %v28 = vand.u32 %v27, 127
    %29 = vset.pattern.permute.xlu0 0
    %30 = vperm.xlu0 %29, %v19
    %v31 = vpop.permute.xlu0 %30
    %32 = vset.pattern.permute.xlu0 0
    %33 = vperm.xlu0 %32, %v20
    %v34 = vpop.permute.xlu0 %33
    %35 = vset.pattern.permute.xlu0 0
    %36 = vperm.xlu0 %35, %v21
    %v37 = vpop.permute.xlu0 %36
    %38 = vset.pattern.permute.xlu0 0
    %39 = vperm.xlu0 %38, %v22
    %v40 = vpop.permute.xlu0 %39
    %41 = vset.pattern.permute.xlu0 0
    %42 = vperm.xlu0 %41, %v23
    %v43 = vpop.permute.xlu0 %42
    %44 = vset.pattern.permute.xlu0 0
    %45 = vperm.xlu0 %44, %v24
    %v46 = vpop.permute.xlu0 %45
    %47 = vset.pattern.permute.xlu0 0
    %48 = vperm.xlu0 %47, %v25
    %v49 = vpop.permute.xlu0 %48
    %50 = vset.pattern.permute.xlu0 0
    %51 = vperm.xlu0 %50, %v26
    %v52 = vpop.permute.xlu0 %51
    %vm53 = vcmp.eq.s32.totalorder %v31, %v28
    %vm54 = vcmp.eq.s32.totalorder %v34, %v28
    %vm55 = vcmp.eq.s32.totalorder %v37, %v28
    %vm56 = vcmp.eq.s32.totalorder %v40, %v28
    %vm57 = vcmp.eq.s32.totalorder %v43, %v28
    %vm58 = vcmp.eq.s32.totalorder %v46, %v28
    %vm59 = vcmp.eq.s32.totalorder %v49, %v28
    %vm60 = vcmp.eq.s32.totalorder %v52, %v28
    %v61 = vadd.s32 %v19, 32
    %v62 = vadd.s32 %v20, 32
    %v63 = vadd.s32 %v21, 32
    %v64 = vadd.s32 %v22, 32
    %v65 = vadd.s32 %v23, 32
    %v66 = vadd.s32 %v24, 32
    %v67 = vadd.s32 %v25, 32
    %v68 = vadd.s32 %v26, 32
    %69 = vset.pattern.permute.xlu0 1
    %70 = vperm.xlu0 %69, %v61
    %v71 = vpop.permute.xlu0 %70
    %72 = vset.pattern.permute.xlu0 1
    %73 = vperm.xlu0 %72, %v62
    %v74 = vpop.permute.xlu0 %73
    %75 = vset.pattern.permute.xlu0 1
    %76 = vperm.xlu0 %75, %v63
    %v77 = vpop.permute.xlu0 %76
    %78 = vset.pattern.permute.xlu0 1
    %79 = vperm.xlu0 %78, %v64
    %v80 = vpop.permute.xlu0 %79
    %81 = vset.pattern.permute.xlu0 1
    %82 = vperm.xlu0 %81, %v65
    %v83 = vpop.permute.xlu0 %82
    %84 = vset.pattern.permute.xlu0 1
    %85 = vperm.xlu0 %84, %v66
    %v86 = vpop.permute.xlu0 %85
    %87 = vset.pattern.permute.xlu0 1
    %88 = vperm.xlu0 %87, %v67
    %v89 = vpop.permute.xlu0 %88
    %90 = vset.pattern.permute.xlu0 1
    %91 = vperm.xlu0 %90, %v68
    %v92 = vpop.permute.xlu0 %91
    %vm93 = vcmp.eq.s32.totalorder %v71, %v28
    %vm94 = vcmp.eq.s32.totalorder %v74, %v28
    %vm95 = vcmp.eq.s32.totalorder %v77, %v28
    %vm96 = vcmp.eq.s32.totalorder %v80, %v28
    %vm97 = vcmp.eq.s32.totalorder %v83, %v28
    %vm98 = vcmp.eq.s32.totalorder %v86, %v28
    %vm99 = vcmp.eq.s32.totalorder %v89, %v28
    %vm100 = vcmp.eq.s32.totalorder %v92, %v28
    %vm101 = vmor %vm53, %vm93
    %vm102 = vmor %vm54, %vm94
    %vm103 = vmor %vm55, %vm95
    %vm104 = vmor %vm56, %vm96
    %vm105 = vmor %vm57, %vm97
    %vm106 = vmor %vm58, %vm98
    %vm107 = vmor %vm59, %vm99
    %vm108 = vmor %vm60, %vm100
    %v109 = vadd.s32 %v19, 64
    %v110 = vadd.s32 %v20, 64
    %v111 = vadd.s32 %v21, 64
    %v112 = vadd.s32 %v22, 64
    %v113 = vadd.s32 %v23, 64
    %v114 = vadd.s32 %v24, 64
    %v115 = vadd.s32 %v25, 64
    %v116 = vadd.s32 %v26, 64
    %117 = vset.pattern.permute.xlu0 2
    %118 = vperm.xlu0 %117, %v109
    %v119 = vpop.permute.xlu0 %118
    %120 = vset.pattern.permute.xlu0 2
    %121 = vperm.xlu0 %120, %v110
    %v122 = vpop.permute.xlu0 %121
    %123 = vset.pattern.permute.xlu0 2
    %124 = vperm.xlu0 %123, %v111
    %v125 = vpop.permute.xlu0 %124
    %126 = vset.pattern.permute.xlu0 2
    %127 = vperm.xlu0 %126, %v112
    %v128 = vpop.permute.xlu0 %127
    %129 = vset.pattern.permute.xlu0 2
    %130 = vperm.xlu0 %129, %v113
    %v131 = vpop.permute.xlu0 %130
    %132 = vset.pattern.permute.xlu0 2
    %133 = vperm.xlu0 %132, %v114
    %v134 = vpop.permute.xlu0 %133
    %135 = vset.pattern.permute.xlu0 2
    %136 = vperm.xlu0 %135, %v115
    %v137 = vpop.permute.xlu0 %136
    %138 = vset.pattern.permute.xlu0 2
    %139 = vperm.xlu0 %138, %v116
    %v140 = vpop.permute.xlu0 %139
    %vm141 = vcmp.eq.s32.totalorder %v119, %v28
    %vm142 = vcmp.eq.s32.totalorder %v122, %v28
    %vm143 = vcmp.eq.s32.totalorder %v125, %v28
    %vm144 = vcmp.eq.s32.totalorder %v128, %v28
    %vm145 = vcmp.eq.s32.totalorder %v131, %v28
    %vm146 = vcmp.eq.s32.totalorder %v134, %v28
    %vm147 = vcmp.eq.s32.totalorder %v137, %v28
    %vm148 = vcmp.eq.s32.totalorder %v140, %v28
    %vm149 = vmor %vm101, %vm141
    %vm150 = vmor %vm102, %vm142
    %vm151 = vmor %vm103, %vm143
    %vm152 = vmor %vm104, %vm144
    %vm153 = vmor %vm105, %vm145
    %vm154 = vmor %vm106, %vm146
    %vm155 = vmor %vm107, %vm147
    %vm156 = vmor %vm108, %vm148
    %v157 = vadd.s32 %v19, 96
    %v158 = vadd.s32 %v20, 96
    %v159 = vadd.s32 %v21, 96
    %v160 = vadd.s32 %v22, 96
    %v161 = vadd.s32 %v23, 96
    %v162 = vadd.s32 %v24, 96
    %v163 = vadd.s32 %v25, 96
    %v164 = vadd.s32 %v26, 96
    %165 = vset.pattern.permute.xlu0 3
    %166 = vperm.xlu0 %165, %v157
    %v167 = vpop.permute.xlu0 %166
    %168 = vset.pattern.permute.xlu0 3
    %169 = vperm.xlu0 %168, %v158
    %v170 = vpop.permute.xlu0 %169
    %171 = vset.pattern.permute.xlu0 3
    %172 = vperm.xlu0 %171, %v159
    %v173 = vpop.permute.xlu0 %172
    %174 = vset.pattern.permute.xlu0 3
    %175 = vperm.xlu0 %174, %v160
    %v176 = vpop.permute.xlu0 %175
    %177 = vset.pattern.permute.xlu0 3
    %178 = vperm.xlu0 %177, %v161
    %v179 = vpop.permute.xlu0 %178
    %180 = vset.pattern.permute.xlu0 3
    %181 = vperm.xlu0 %180, %v162
    %v182 = vpop.permute.xlu0 %181
    %183 = vset.pattern.permute.xlu0 3
    %184 = vperm.xlu0 %183, %v163
    %v185 = vpop.permute.xlu0 %184
    %186 = vset.pattern.permute.xlu0 3
    %187 = vperm.xlu0 %186, %v164
    %v188 = vpop.permute.xlu0 %187
    %vm189 = vcmp.eq.s32.totalorder %v167, %v28
    %vm190 = vcmp.eq.s32.totalorder %v170, %v28
    %vm191 = vcmp.eq.s32.totalorder %v173, %v28
    %vm192 = vcmp.eq.s32.totalorder %v176, %v28
    %vm193 = vcmp.eq.s32.totalorder %v179, %v28
    %vm194 = vcmp.eq.s32.totalorder %v182, %v28
    %vm195 = vcmp.eq.s32.totalorder %v185, %v28
    %vm196 = vcmp.eq.s32.totalorder %v188, %v28
    %vm197 = vmor %vm149, %vm189
    %vm198 = vmor %vm150, %vm190
    %vm199 = vmor %vm151, %vm191
    %vm200 = vmor %vm152, %vm192
    %vm201 = vmor %vm153, %vm193
    %vm202 = vmor %vm154, %vm194
    %vm203 = vmor %vm155, %vm195
    %vm204 = vmor %vm156, %vm196
    %v205 = vsel %vm197, 1, 0
    %v206 = vsel %vm198, 1, 0
    %v207 = vsel %vm199, 1, 0
    %v208 = vsel %vm200, 1, 0
    %v209 = vsel %vm201, 1, 0
    %v210 = vsel %vm202, 1, 0
    %v211 = vsel %vm203, 1, 0
    %v212 = vsel %vm204, 1, 0
    %v213 = vcvt.s32.f32 %v205
    %v214 = vcvt.s32.f32 %v206
    %v215 = vcvt.s32.f32 %v207
    %v216 = vcvt.s32.f32 %v208
    %v217 = vcvt.s32.f32 %v209
    %v218 = vcvt.s32.f32 %v210
    %v219 = vcvt.s32.f32 %v211
    %v220 = vcvt.s32.f32 %v212
    %v221 = vpack.c.bf16 %v214, %v213
    %v222 = vpack.c.bf16 %v216, %v215
    %v223 = vpack.c.bf16 %v218, %v217
    %v224 = vpack.c.bf16 %v220, %v219
    %v225 = vld [vmem:[%s0] sm:$0xf]
    %v226 = vld [vmem:[%s0 + $0x4] sm:$0xf]
    %v227 = vld [vmem:[%s0 + $0x8] sm:$0xf]
    %v228 = vld [vmem:[%s0 + $0xc] sm:$0xf]
    %v229 = vld [vmem:[%s0 + $0x10] sm:$0xf]
    %v230 = vld [vmem:[%s0 + $0x14] sm:$0xf]
    %v231 = vld [vmem:[%s0 + $0x18] sm:$0xf]
    %v232 = vld [vmem:[%s0 + $0x1c] sm:$0xf]
    %v241 = vunpack.c.l.b16 %v225
    %v242 = vunpack.c.l.b16 %v226
    %v243 = vunpack.c.l.b16 %v227
    %v244 = vunpack.c.l.b16 %v228
    %v245 = vunpack.c.l.b16 %v229
    %v246 = vunpack.c.l.b16 %v230
    %v247 = vunpack.c.l.b16 %v231
    %v248 = vunpack.c.l.b16 %v232
    %v249 = vpack.c.b16 %v242, %v241
    %v250 = vpack.c.b16 %v244, %v243
    %v251 = vpack.c.b16 %v246, %v245
    %v252 = vpack.c.b16 %v248, %v247
    %v253 = vld [vmem:[%s2] sm:$0xf]
    %v254 = vld [vmem:[%s2 + $0x4] sm:$0xf]
    %v255 = vld [vmem:[%s2 + $0x8] sm:$0xf]
    %v256 = vld [vmem:[%s2 + $0xc] sm:$0xf]
    %v257 = vld [vmem:[%s2 + $0x10] sm:$0xf]
    %v258 = vld [vmem:[%s2 + $0x14] sm:$0xf]
    %v259 = vld [vmem:[%s2 + $0x18] sm:$0xf]
    %v260 = vld [vmem:[%s2 + $0x1c] sm:$0xf]
    %v261 = vld [vmem:[%s2 + $0x20] sm:$0xf]
    %v262 = vld [vmem:[%s2 + $0x24] sm:$0xf]
    %v263 = vld [vmem:[%s2 + $0x28] sm:$0xf]
    %v264 = vld [vmem:[%s2 + $0x2c] sm:$0xf]
    %v265 = vld [vmem:[%s2 + $0x30] sm:$0xf]
    %v266 = vld [vmem:[%s2 + $0x34] sm:$0xf]
    %v267 = vld [vmem:[%s2 + $0x38] sm:$0xf]
    %v268 = vld [vmem:[%s2 + $0x3c] sm:$0xf]
    %v269 = vld [vmem:[%s2 + $0x40] sm:$0xf]
    %v270 = vld [vmem:[%s2 + $0x44] sm:$0xf]
    %v271 = vld [vmem:[%s2 + $0x48] sm:$0x1]
    %v272 = vld [vmem:[%s3] sm:$0xf]
    %v273 = vld [vmem:[%s3 + $0x4] sm:$0xf]
    %v274 = vld [vmem:[%s3 + $0x8] sm:$0xf]
    %v275 = vld [vmem:[%s3 + $0xc] sm:$0xf]
    %v276 = vld [vmem:[%s3 + $0x10] sm:$0xf]
    %v277 = vld [vmem:[%s3 + $0x14] sm:$0xf]
    %v278 = vld [vmem:[%s3 + $0x18] sm:$0xf]
    %v279 = vld [vmem:[%s3 + $0x1c] sm:$0xf]
    %v280 = vunpack.c.l.bf16 %v272
    %v281 = vunpack.c.l.bf16 %v273
    %v282 = vunpack.c.l.bf16 %v274
    %v283 = vunpack.c.l.bf16 %v275
    %v284 = vunpack.c.l.bf16 %v276
    %v285 = vunpack.c.l.bf16 %v277
    %v286 = vunpack.c.l.bf16 %v278
    %v287 = vunpack.c.l.bf16 %v279
    %v307 = vunpack.c.l.b16 %v253
    %v308 = vunpack.c.l.b16 %v254
    %v309 = vunpack.c.l.b16 %v255
    %v310 = vunpack.c.l.b16 %v256
    %v311 = vunpack.c.l.b16 %v257
    %v312 = vunpack.c.l.b16 %v258
    %v313 = vunpack.c.l.b16 %v259
    %v314 = vunpack.c.l.b16 %v260
    %v315 = vunpack.c.l.b16 %v261
    %v316 = vunpack.c.l.b16 %v262
    %v317 = vunpack.c.l.b16 %v263
    %v318 = vunpack.c.l.b16 %v264
    %v319 = vunpack.c.l.b16 %v265
    %v320 = vunpack.c.l.b16 %v266
    %v321 = vunpack.c.l.b16 %v267
    %v322 = vunpack.c.l.b16 %v268
    %v323 = vunpack.c.l.b16 %v269
    %v324 = vunpack.c.l.b16 %v270
    %v325 = vunpack.c.l.b16 %v271
    %v326 = vpack.c.b16 %v308, %v307
    %v327 = vpack.c.b16 %v310, %v309
    %v328 = vpack.c.b16 %v312, %v311
    %v329 = vpack.c.b16 %v314, %v313
    %v330 = vpack.c.b16 %v316, %v315
    %v331 = vpack.c.b16 %v318, %v317
    %v332 = vpack.c.b16 %v320, %v319
    %v333 = vpack.c.b16 %v322, %v321
    %v334 = vpack.c.b16 %v324, %v323
    %v335 = vpack.c.b16 %v325, %v325
    %vm345 = vcmask 146432
    %v347 = vsel %vm345, %v249, 0
    %v350 = vsel %vm345, %v250, 0
    %v353 = vsel %vm345, %v251, 0
    %v356 = vsel %vm345, %v252, 0
    %vm358 = vcmask 1040384
    %v360 = vsel %vm358, %v335, 0
    %362 = vmatprep.subr.bf16.mxu0 0
    %363 = vmatpush1.bf16.msra.mxu0 %v326
    %364 = vmatprep.subr.bf16.mxu0 0
    %365 = vmatpush1.bf16.msra.mxu0 %v327
    %366 = vmatprep.subr.bf16.mxu0 0
    %367 = vmatpush1.bf16.msra.mxu0 %v328
    %368 = vmatprep.subr.bf16.mxu0 0
    %369 = vmatpush1.bf16.msra.mxu0 %v329
    %370 = vmatprep.subr.bf16.mxu0 0
    %371 = vmatpush1.bf16.msra.mxu0 %v330
    %372 = vmatprep.subr.bf16.mxu0 0
    %373 = vmatpush1.bf16.msra.mxu0 %v331
    %374 = vmatprep.subr.bf16.mxu0 0
    %375 = vmatpush1.bf16.msra.mxu0 %v332
    %376 = vmatprep.subr.bf16.mxu0 0
    %377 = vmatpush1.bf16.msra.mxu0 %v333
    %378 = vmatprep.subr.bf16.mxu0 0
    %379 = vmatpush1.bf16.msra.mxu0 %v334
    %380 = vmatprep.subr.bf16.mxu0 0
    %381 = vmatpush1.bf16.msra.mxu0 %v360
    %382 = vmatprep.subr.bf16.mxu0 0
    %383 = vmatpush1.bf16.msra.mxu0 0
    %384 = vmatprep.subr.bf16.mxu0 0
    %385 = vmatpush1.bf16.msra.mxu0 0
    %386 = vmatprep.subr.bf16.mxu0 0
    %387 = vmatpush1.bf16.msra.mxu0 0
    %388 = vmatprep.subr.bf16.mxu0 0
    %389 = vmatpush1.bf16.msra.mxu0 0
    %390 = vmatprep.subr.bf16.mxu0 0
    %391 = vmatpush1.bf16.msra.mxu0 0
    %392 = vmatprep.subr.bf16.mxu0 0
    %393 = vmatpush1.bf16.msra.mxu0 0
    %394 = vmatprep.mubr.bf16.mxu0 %v347
    %395 = vmatmul.mubr.bf16.gmra.mrb[0].mxu0 %v221
    %v396 = vpop.f32.mrb[0].mxu0
    %v397 = vadd.f32 %v280, %v396
    %v398 = vpop.f32.mrb[0].mxu0
    %v399 = vpop.f32.mrb[0].mxu0
    %v400 = vadd.f32 %v281, %v399
    %v401 = vpop.f32.mrb[0].mxu0
    %402 = vmatprep.mubr.bf16.mxu0 %v350
    %403 = vmatmul.mubr.bf16.gmra.mrb[0].mxu0 %v222
    %v404 = vpop.f32.mrb[0].mxu0
    %v405 = vadd.f32 %v282, %v404
    %v406 = vpop.f32.mrb[0].mxu0
    %v407 = vpop.f32.mrb[0].mxu0
    %v408 = vadd.f32 %v283, %v407
    %v409 = vpop.f32.mrb[0].mxu0
    %410 = vmatprep.mubr.bf16.mxu0 %v353
    %411 = vmatmul.mubr.bf16.gmra.mrb[0].mxu0 %v223
    %v412 = vpop.f32.mrb[0].mxu0
    %v413 = vadd.f32 %v284, %v412
    %v414 = vpop.f32.mrb[0].mxu0
    %v415 = vpop.f32.mrb[0].mxu0
    %v416 = vadd.f32 %v285, %v415
    %v417 = vpop.f32.mrb[0].mxu0
    %418 = vmatprep.mubr.bf16.mxu0 %v356
    %419 = vmatmul.mubr.bf16.gmra.mrb[0].mxu0 %v224
    %v420 = vpop.f32.mrb[0].mxu0
    %v421 = vadd.f32 %v286, %v420
    %v422 = vpop.f32.mrb[0].mxu0
    %v423 = vpop.f32.mrb[0].mxu0
    %v424 = vadd.f32 %v287, %v423
    %v425 = vpop.f32.mrb[0].mxu0
    %426 = vdwg.mxu0
    %427 = vst [vmem:[#allocation2] sm:$0xff] %v397
    %428 = vst [vmem:[#allocation2 + $0x8] sm:$0xff] %v400
    %429 = vst [vmem:[#allocation2 + $0x10] sm:$0xff] %v405
    %430 = vst [vmem:[#allocation2 + $0x18] sm:$0xff] %v408
    %431 = vst [vmem:[#allocation2 + $0x20] sm:$0xff] %v413
    %432 = vst [vmem:[#allocation2 + $0x28] sm:$0xff] %v416
    %433 = vst [vmem:[#allocation2 + $0x30] sm:$0xff] %v421
    %434 = vst [vmem:[#allocation2 + $0x38] sm:$0xff] %v424
    // Predicated region
    $region18: #{tpu_custom_call.1} parent=1 // pred_check
      _
    $region19: #{tpu_custom_call.1} parent=1 // pred_check_branch
      %436 = sbr.rel (0) target = $region21
    $region20: #{tpu_custom_call.1} parent=1 // pred_region
      %s438 = ssub.s32 1024, 1024
      %439 = vsyncadd [#allocation3], %s438
      %s440 = sshll.u32 [#allocation2], 4
      %s441 = int_to_ptr.vmem [resolvable:$true] %s440
      %446 = dma.vmem_to_hbm [thread:$0]  %s441, 1024, %s4, [#allocation3], 128, 128, 8
    $region21: #{tpu_custom_call.1} parent=1 // pred_fallthru
      _
    // Predicated region
    $region22: #{tpu_custom_call.1} parent=1 // pred_check
      _
    $region23: #{tpu_custom_call.1} parent=1 // pred_check_branch
      %448 = sbr.rel (0) target = $region25
    $region24: #{tpu_custom_call.1} parent=1 // pred_region
      %449 = dma.done [#allocation3], 1024
    $region25: #{tpu_custom_call.1} parent=1 // pred_fallthru
      _
    %450 = vsyncpa [#allocation3], 1

</llo_original>
